<compile_context>
chip_gen: v6e
topology: v6e:2x2x1
jax: 0.10.0
libtpu: 0.0.40
codegen_flags: <defaults>
</compile_context>

<pallas_src>
import functools

import jax
import jax.numpy as jnp
from jax import lax
from jax.experimental import pallas as pl
from jax.experimental.pallas import tpu as pltpu

n_embd = 384
block_size = 256
dropout = 0.2  # unused in eval-mode forward


def heads_kernel(x_ref, w_ref, o_ref, *, num_heads, head_size):
    # x_ref: (Bb, T, C) bf16 batch tile
    # w_ref: (C, NH*3H) bf16, per-head column groups [Wk_h | Wq_h*C**-0.5 | Wv_h]
    # o_ref: (Bb, T, NH*H)
    Bb, T, C = x_ref.shape
    NH, H = num_heads, head_size

    # Fused QKV projection for all heads on the MXU: fold batch into M, N = NH*3H.
    x2d = x_ref[...].reshape(Bb * T, C)
    qkv = jnp.dot(x2d, w_ref[...], preferred_element_type=jnp.float32)
    qkv = qkv.reshape(Bb, T, NH * 3 * H)

    # Causal mask; finite large-negative fill avoids inf-inf -> NaN.
    row = lax.broadcasted_iota(jnp.int32, (T, T), 0)
    col = lax.broadcasted_iota(jnp.int32, (T, T), 1)
    causal = col <= row

    outs = []
    # Static unroll over heads (NH is small: 1..6 in nanogpt).
    for h in range(NH):
        base = h * 3 * H
        k = qkv[..., base + 0 * H:base + 1 * H]
        q = qkv[..., base + 1 * H:base + 2 * H]   # C**-0.5 already folded into Wq
        v = qkv[..., base + 2 * H:base + 3 * H]

        # Attention scores: batched contraction over H, no explicit k.T.
        wei = lax.dot_general(
            q.astype(jnp.bfloat16), k.astype(jnp.bfloat16),
            dimension_numbers=(((2,), (2,)), ((0,), (0,))),
            preferred_element_type=jnp.float32)                    # (Bb, T, T)
        wei = jnp.where(causal, wei, jnp.float32(-1e30))

        # Numerically stable softmax in f32 (EUP exp; approx reciprocal).
        # (bf16 exp is an option on v6e/v7x if the EUP slot saturates; never on v5e.)
        wei = wei - jnp.max(wei, axis=-1, keepdims=True)
        e = jnp.exp(wei)
        p = e * pl.reciprocal(jnp.sum(e, axis=-1, keepdims=True), approx=True)

        # Dropout: eval-mode identity (see TODO at top).

        out_h = lax.dot_general(
            p.astype(jnp.bfloat16), v.astype(jnp.bfloat16),
            dimension_numbers=(((2,), (1,)), ((0,), (0,))),
            preferred_element_type=jnp.float32)                    # (Bb, T, H)
        outs.append(out_h.astype(o_ref.dtype))

    # Lane-dense output slab: heads concatenated on the last (lane) dim.
    o_ref[...] = outs[0] if NH == 1 else jnp.concatenate(outs, axis=-1)


def _tpu_vmem_capacity_bytes():
    try:
        return int(pltpu.get_tpu_info().vmem_capacity_bytes)
    except Exception:
        return 128 * 1024 * 1024


def _pack_qkv_weights(wk_t, wq_t, wv_t, scale):
    """wk_t/wq_t/wv_t: (NH, C, H) pre-transposed nn.Linear weights.
    Returns (C, NH*3H) bf16 with per-head column groups [Wk_h | Wq_h*scale | Wv_h]."""
    w = jnp.concatenate([wk_t, wq_t * scale, wv_t], axis=-1)      # (NH, C, 3H)
    NH, C, H3 = w.shape
    w = jnp.transpose(w, (1, 0, 2)).reshape(C, NH * H3)           # (C, NH*3H)
    return w.astype(jnp.bfloat16)


def _fused_attention_forward(x, w_qkv, num_heads, head_size, *,
                             out_dtype, batch_block=None):
    B, T, C = x.shape
    assert w_qkv.shape == (C, num_heads * 3 * head_size)

    vmem_cap = _tpu_vmem_capacity_bytes()
    small_vmem = vmem_cap <= 64 * (1 << 20)      # v7x-class: 64 MiB / TC, 2 TCs

    if batch_block is None:
        batch_block = 8 if small_vmem else 16
    batch_block = max(1, min(batch_block, B))
    # On 2-TC parts keep >=2 grid steps so the "parallel" batch axis shards.
    if small_vmem and B >= 2 and pl.cdiv(B, batch_block) < 2:
        batch_block = (B + 1) // 2

    # Explicit scoped-VMEM limit: the defaults (16/32 MiB) are far below physical.
    vmem_limit = int(min(vmem_cap - 16 * (1 << 20), 100 * (1 << 20)))

    # cdiv grid: Pallas pads the tail batch tile; padded rows are independent
    # batch entries and their out-of-bounds stores are dropped.
    grid = (pl.cdiv(B, batch_block),)

    kernel = functools.partial(heads_kernel,
                               num_heads=num_heads, head_size=head_size)

    # Feed x as bf16: halves the dominant HBM DMA. In a full model the
    # activations should already be bf16 so this cast fuses into the producer.
    x_bf16 = x if x.dtype == jnp.bfloat16 else x.astype(jnp.bfloat16)

    return pl.pallas_call(
        kernel,
        out_shape=jax.ShapeDtypeStruct((B, T, num_heads * head_size), out_dtype),
        grid=grid,
        in_specs=[
            pl.BlockSpec((batch_block, T, C), lambda b: (b, 0, 0)),           # x tile
            pl.BlockSpec((C, num_heads * 3 * head_size), lambda b: (0, 0)),    # W_qkv
        ],
        out_specs=pl.BlockSpec((batch_block, T, num_heads * head_size),
                               lambda b: (b, 0, 0)),
        compiler_params=pltpu.CompilerParams(
            dimension_semantics=("parallel",),
            vmem_limit_bytes=vmem_limit),
    )(x_bf16, w_qkv)


def head_forward(x, wk_t, wq_t, wv_t, *, out_dtype=None, batch_block=None):
    """Single `Head` forward (module-faithful, eval-mode dropout).
    x: (B, T, C); wk_t/wq_t/wv_t: (C, H) pre-transposed nn.Linear weights."""
    B, T, C = x.shape
    H = wk_t.shape[-1]
    scale = jnp.float32(C) ** -0.5          # module scales by C**-0.5 (C = n_embd)
    w_qkv = _pack_qkv_weights(wk_t[None], wq_t[None], wv_t[None], scale)
    if out_dtype is None:
        out_dtype = x.dtype
    return _fused_attention_forward(x, w_qkv, 1, H,
                                    out_dtype=out_dtype, batch_block=batch_block)


def multi_head_forward(x, wk_t, wq_t, wv_t, *, out_dtype=None, batch_block=None):
    """Fused sibling heads (parent MultiHeadAttention's concat of Heads) in one
    pallas_call. wk_t/wq_t/wv_t: (NH, C, H). Returns (B, T, NH*H)."""
    B, T, C = x.shape
    NH, _, H = wk_t.shape
    scale = jnp.float32(C) ** -0.5
    w_qkv = _pack_qkv_weights(wk_t, wq_t, wv_t, scale)
    if out_dtype is None:
        out_dtype = x.dtype
    return _fused_attention_forward(x, w_qkv, NH, H,
                                    out_dtype=out_dtype, batch_block=batch_block)


def reference_head(x, wk_t, wq_t, wv_t):
    """Pure-JAX f32 reference mirroring the PyTorch forward (eval-mode dropout)."""
    B, T, C = x.shape
    k = x @ wk_t
    q = x @ wq_t
    v = x @ wv_t
    wei = (q @ jnp.swapaxes(k, -2, -1)) * (C ** -0.5)
    mask = jnp.tril(jnp.ones((T, T), dtype=bool))
    wei = jnp.where(mask, wei, -jnp.inf)
    wei = jax.nn.softmax(wei, axis=-1)
    return wei @ v


if __name__ == "__main__":
    head_size = 64
    num_heads = 6
    B, T, C = 2, 8, n_embd   # T <= block_size

    key = jax.random.PRNGKey(0)
    kx, kk, kq, kv, kmk, kmq, kmv = jax.random.split(key, 7)

    x = jax.random.normal(kx, (B, T, C), dtype=jnp.float32)

    # Deterministic nn.Linear-style init: U(-1/sqrt(C), 1/sqrt(C)), stored as W^T.
    bound = 1.0 / (C ** 0.5)
    wk_t = jax.random.uniform(kk, (C, head_size), jnp.float32, -bound, bound)
    wq_t = jax.random.uniform(kq, (C, head_size), jnp.float32, -bound, bound)
    wv_t = jax.random.uniform(kv, (C, head_size), jnp.float32, -bound, bound)

    # --- Single-head path (matches the PyTorch `Head` module). ---
    out = head_forward(x, wk_t, wq_t, wv_t)
    out = jax.block_until_ready(out)
    ref = reference_head(x, wk_t, wq_t, wv_t)
    assert out.shape == (B, T, head_size)
    # bf16 MXU operands vs. f32 reference -> looser tolerance.
    assert jnp.allclose(out, ref, atol=2e-2, rtol=2e-2), "single-head mismatch"

    # --- Fused sibling-heads path (one pallas_call for all 6 heads). ---
    wk_all = jax.random.uniform(kmk, (num_heads, C, head_size), jnp.float32, -bound, bound)
    wq_all = jax.random.uniform(kmq, (num_heads, C, head_size), jnp.float32, -bound, bound)
    wv_all = jax.random.uniform(kmv, (num_heads, C, head_size), jnp.float32, -bound, bound)

    out_mh = multi_head_forward(x, wk_all, wq_all, wv_all)
    out_mh = jax.block_until_ready(out_mh)
    ref_mh = jnp.concatenate(
        [reference_head(x, wk_all[h], wq_all[h], wv_all[h]) for h in range(num_heads)],
        axis=-1)
    assert out_mh.shape == (B, T, num_heads * head_size)
    assert jnp.allclose(out_mh, ref_mh, atol=2e-2, rtol=2e-2), "multi-head mismatch"

    print("KERNEL_OK")
</pallas_src>

<mosaic_0001>
module attributes {stable_mosaic.version = 11 : i64} {
  func.func @heads_kernel(%arg0: i32, %arg1: memref<2x8x384xbf16, #tpu.memory_space<vmem>>, %arg2: memref<384x192xbf16, #tpu.memory_space<vmem>>, %arg3: memref<2x8x64xf32, #tpu.memory_space<vmem>>) attributes {dimension_semantics = [#tpu.dimension_semantics<parallel>], iteration_bounds = array<i64: 1>, scalar_prefetch = 0 : i64, scratch_operands = 0 : i64, tpu.core_type = #tpu.core_type<tc>, window_params = [{transform_indices = @transform_0, window_bounds = array<i64: 2, 8, 384>}, {pipeline_mode = #tpu.pipeline_mode<synchronous>, transform_indices = @transform_1, window_bounds = array<i64: 384, 192>}, {transform_indices = @transform_2, window_bounds = array<i64: 2, 8, 64>}]} {
    %c0 = arith.constant 0 : index
    %c0_0 = arith.constant 0 : index
    %c0_1 = arith.constant 0 : index
    %0 = vector.load %arg1[%c0, %c0_0, %c0_1] : memref<2x8x384xbf16, #tpu.memory_space<vmem>>, vector<2x8x384xbf16>
    %1 = vector.shape_cast %0 : vector<2x8x384xbf16> to vector<16x384xbf16>
    %c0_2 = arith.constant 0 : index
    %c0_3 = arith.constant 0 : index
    %2 = vector.load %arg2[%c0_2, %c0_3] : memref<384x192xbf16, #tpu.memory_space<vmem>>, vector<384x192xbf16>
    %cst = arith.constant dense<0.000000e+00> : vector<16x192xf32>
    %3 = tpu.matmul %1, %2, %cst {dimension_numbers = #tpu.dot_dimension_numbers<[1], [0], [0], [1], [0, 0, 1, 1], [], []>} : vector<16x384xbf16>, vector<384x192xbf16>, vector<16x192xf32> -> vector<16x192xf32>
    %4 = vector.shape_cast %3 : vector<16x192xf32> to vector<2x8x192xf32>
    %5 = tpu.iota {dimensions = array<i32: 0>} : vector<8x8xi32>
    %6 = tpu.iota {dimensions = array<i32: 1>} : vector<8x8xi32>
    %7 = arith.cmpi sle, %6, %5 : vector<8x8xi32>
    %8 = vector.extract_strided_slice %4 {offsets = [0, 0, 0], sizes = [2, 8, 64], strides = [1, 1, 1]} : vector<2x8x192xf32> to vector<2x8x64xf32>
    %9 = vector.extract_strided_slice %4 {offsets = [0, 0, 64], sizes = [2, 8, 64], strides = [1, 1, 1]} : vector<2x8x192xf32> to vector<2x8x64xf32>
    %10 = vector.extract_strided_slice %4 {offsets = [0, 0, 128], sizes = [2, 8, 64], strides = [1, 1, 1]} : vector<2x8x192xf32> to vector<2x8x64xf32>
    %11 = arith.truncf %9 : vector<2x8x64xf32> to vector<2x8x64xbf16>
    %12 = arith.truncf %8 : vector<2x8x64xf32> to vector<2x8x64xbf16>
    %cst_4 = arith.constant dense<0.000000e+00> : vector<2x8x8xf32>
    %13 = tpu.matmul %11, %12, %cst_4 {dimension_numbers = #tpu.dot_dimension_numbers<[2], [2], [1], [1], [0, 0, 0, 1, 1, 1], [0], [0]>} : vector<2x8x64xbf16>, vector<2x8x64xbf16>, vector<2x8x8xf32> -> vector<2x8x8xf32>
    %cst_5 = arith.constant -1.000000e+30 : f32
    %14 = vector.shape_cast %7 : vector<8x8xi1> to vector<1x8x8xi1>
    %15 = vector.broadcast %14 : vector<1x8x8xi1> to vector<2x8x8xi1>
    %16 = vector.broadcast %cst_5 : f32 to vector<2x8x8xf32>
    %17 = arith.select %15, %13, %16 : vector<2x8x8xi1>, vector<2x8x8xf32>
    %cst_6 = arith.constant dense<0xFF800000> : vector<2x8xf32>
    %18 = vector.multi_reduction <maximumf>, %17, %cst_6 [2] : vector<2x8x8xf32> to vector<2x8xf32>
    %19 = vector.shape_cast %18 : vector<2x8xf32> to vector<2x8x1xf32>
    %20 = vector.broadcast %19 : vector<2x8x1xf32> to vector<2x8x8xf32>
    %21 = arith.subf %17, %20 : vector<2x8x8xf32>
    %22 = math.exp %21 : vector<2x8x8xf32>
    %cst_7 = arith.constant dense<0.000000e+00> : vector<2x8xf32>
    %23 = vector.multi_reduction <add>, %22, %cst_7 [2] : vector<2x8x8xf32> to vector<2x8xf32>
    %24 = vector.shape_cast %23 : vector<2x8xf32> to vector<2x8x1xf32>
    %25 = tpu.reciprocal %24 {approx = true} : vector<2x8x1xf32> -> vector<2x8x1xf32>
    %26 = vector.broadcast %25 : vector<2x8x1xf32> to vector<2x8x8xf32>
    %27 = arith.mulf %22, %26 : vector<2x8x8xf32>
    %28 = arith.truncf %27 : vector<2x8x8xf32> to vector<2x8x8xbf16>
    %29 = arith.truncf %10 : vector<2x8x64xf32> to vector<2x8x64xbf16>
    %cst_8 = arith.constant dense<0.000000e+00> : vector<2x8x64xf32>
    %30 = tpu.matmul %28, %29, %cst_8 {dimension_numbers = #tpu.dot_dimension_numbers<[2], [1], [1], [2], [0, 0, 0, 1, 1, 2], [0], [0]>} : vector<2x8x8xbf16>, vector<2x8x64xbf16>, vector<2x8x64xf32> -> vector<2x8x64xf32>
    %c0_9 = arith.constant 0 : index
    %c0_10 = arith.constant 0 : index
    %c0_11 = arith.constant 0 : index
    %31 = vector.load %arg3[%c0_9, %c0_10, %c0_11] : memref<2x8x64xf32, #tpu.memory_space<vmem>>, vector<2x8x64xf32>
    tpu.vector_store %arg3[%c0_9, %c0_10, %c0_11], %30 {strides = array<i32>} : memref<2x8x64xf32, #tpu.memory_space<vmem>>, vector<2x8x64xf32>,
    return
  }
  func.func @transform_0(%arg0: i32) -> (i32, i32, i32) {
    %c0_i32 = arith.constant 0 : i32
    %c0_i32_0 = arith.constant 0 : i32
    %c0_i32_1 = arith.constant 0 : i32
    return %arg0, %c0_i32, %c0_i32_0 : i32, i32, i32
  }
  func.func @transform_1(%arg0: i32) -> (i32, i32) {
    %c0_i32 = arith.constant 0 : i32
    %c0_i32_0 = arith.constant 0 : i32
    %c0_i32_1 = arith.constant 0 : i32
    return %c0_i32, %c0_i32_0 : i32, i32
  }
  func.func @transform_2(%arg0: i32) -> (i32, i32, i32) {
    %c0_i32 = arith.constant 0 : i32
    %c0_i32_0 = arith.constant 0 : i32
    %c0_i32_1 = arith.constant 0 : i32
    return %arg0, %c0_i32, %c0_i32_0 : i32, i32, i32
  }
}

</mosaic_0001>

<llo_original>
// kernel: tpu_custom_call.1
$region0: #{tpu_custom_call.1}
  #allocation0 [shape = 'u32[]', space=smem, size = 0x4, offset = 0x4, fixed_abs, tag = 'smem constant byte address 0x4 - core index']
  #allocation1 [shape = 'u32[144,128]{1,0:T(1,128)}', space=vmem, size = 0x12000, scoped, tag = 'internal scratch']
  %s0 = inlined_call_operand.vmem [shape: bf16[2,8,384], index: 0, kind: input, shape index: {}]
  %s1 = inlined_call_operand.vmem [shape: bf16[384,192], index: 1, kind: input, shape index: {}]
  %s2 = inlined_call_operand.hbm [shape: f32[2,8,64], index: 2, kind: output, shape index: {}]
  %s3 = sld [smem:[#allocation0]]
  $region18: #{tpu_custom_call.1} parent=0
    _
  %s5 = ssub.s32 1, %s3
  %s6 = scalar_select 0, %s5, %s3
  $region1: #{tpu_custom_call.1} parent=0
    #allocation2 [shape = 'u8[8192]{0}', space=vmem, size = 0x2000, scoped, tag = 'output window, operand 0, single buffered']
    #allocation3 [shape = 's32[1]{0}', space=sflag, size = 0x4, scoped, tag = 'scoped memory for tpu_custom_call.1']
    %7 = vsyncpa [#allocation3], 0
    // Predicated region
    $region2: #{tpu_custom_call.1} parent=1 // pred_check
      _
    $region3: #{tpu_custom_call.1} parent=1 // pred_check_branch
      %9 = sbr.rel (0) target = $region5
    $region4: #{tpu_custom_call.1} parent=1 // pred_region
      _
    $region5: #{tpu_custom_call.1} parent=1 // pred_fallthru
      _
    // Predicated region
    $region6: #{tpu_custom_call.1} parent=1 // pred_check
      _
    $region7: #{tpu_custom_call.1} parent=1 // pred_check_branch
      %11 = sbr.rel (0) target = $region9
    $region8: #{tpu_custom_call.1} parent=1 // pred_region
      _
    $region9: #{tpu_custom_call.1} parent=1 // pred_fallthru
      _
    %v13 = vld [vmem:[%s0] sm:$0xff]
    %v14 = vld [vmem:[%s0 + $0x8] sm:$0xf]
    %v15 = vld [vmem:[%s0 + $0xc] sm:$0xff]
    %v16 = vld [vmem:[%s0 + $0x14] sm:$0xf]
    %v17 = vld [vmem:[%s1] sm:$0xff]
    %v18 = vld [vmem:[%s1 + $0x8] sm:$0xff]
    %v19 = vld [vmem:[%s1 + $0x10] sm:$0xff]
    %v20 = vld [vmem:[%s1 + $0x18] sm:$0xff]
    %v21 = vld [vmem:[%s1 + $0x20] sm:$0xff]
    %v22 = vld [vmem:[%s1 + $0x28] sm:$0xff]
    %v23 = vld [vmem:[%s1 + $0x30] sm:$0xff]
    %v24 = vld [vmem:[%s1 + $0x38] sm:$0xff]
    %v25 = vld [vmem:[%s1 + $0x40] sm:$0xff]
    %v26 = vld [vmem:[%s1 + $0x48] sm:$0xff]
    %v27 = vld [vmem:[%s1 + $0x50] sm:$0xff]
    %v28 = vld [vmem:[%s1 + $0x58] sm:$0xff]
    %v29 = vld [vmem:[%s1 + $0x60] sm:$0xff]
    %v30 = vld [vmem:[%s1 + $0x68] sm:$0xff]
    %v31 = vld [vmem:[%s1 + $0x70] sm:$0xff]
    %v32 = vld [vmem:[%s1 + $0x78] sm:$0xff]
    %v33 = vld [vmem:[%s1 + $0x80] sm:$0xff]
    %v34 = vld [vmem:[%s1 + $0x88] sm:$0xff]
    %v35 = vld [vmem:[%s1 + $0x90] sm:$0xff]
    %v36 = vld [vmem:[%s1 + $0x98] sm:$0xff]
    %v37 = vld [vmem:[%s1 + $0xa0] sm:$0xff]
    %v38 = vld [vmem:[%s1 + $0xa8] sm:$0xff]
    %v39 = vld [vmem:[%s1 + $0xb0] sm:$0xff]
    %v40 = vld [vmem:[%s1 + $0xb8] sm:$0xff]
    %v41 = vld [vmem:[%s1 + $0xc0] sm:$0xff]
    %v42 = vld [vmem:[%s1 + $0xc8] sm:$0xff]
    %v43 = vld [vmem:[%s1 + $0xd0] sm:$0xff]
    %v44 = vld [vmem:[%s1 + $0xd8] sm:$0xff]
    %v45 = vld [vmem:[%s1 + $0xe0] sm:$0xff]
    %v46 = vld [vmem:[%s1 + $0xe8] sm:$0xff]
    %v47 = vld [vmem:[%s1 + $0xf0] sm:$0xff]
    %v48 = vld [vmem:[%s1 + $0xf8] sm:$0xff]
    %v49 = vld [vmem:[%s1 + $0x100] sm:$0xff]
    %v50 = vld [vmem:[%s1 + $0x108] sm:$0xff]
    %v51 = vld [vmem:[%s1 + $0x110] sm:$0xff]
    %v52 = vld [vmem:[%s1 + $0x118] sm:$0xff]
    %v53 = vld [vmem:[%s1 + $0x120] sm:$0xff]
    %v54 = vld [vmem:[%s1 + $0x128] sm:$0xff]
    %v55 = vld [vmem:[%s1 + $0x130] sm:$0xff]
    %v56 = vld [vmem:[%s1 + $0x138] sm:$0xff]
    %v57 = vld [vmem:[%s1 + $0x140] sm:$0xff]
    %v58 = vld [vmem:[%s1 + $0x148] sm:$0xff]
    %v59 = vld [vmem:[%s1 + $0x150] sm:$0xff]
    %v60 = vld [vmem:[%s1 + $0x158] sm:$0xff]
    %v61 = vld [vmem:[%s1 + $0x160] sm:$0xff]
    %v62 = vld [vmem:[%s1 + $0x168] sm:$0xff]
    %v63 = vld [vmem:[%s1 + $0x170] sm:$0xff]
    %v64 = vld [vmem:[%s1 + $0x178] sm:$0xff]
    %v69 = vunpack.c.l.b16 %v13
    %v70 = vunpack.c.h.b16 %v13
    %v71 = vunpack.c.l.b16 %v14
    %v72 = vunpack.c.l.b16 %v15
    %v73 = vunpack.c.h.b16 %v15
    %v74 = vunpack.c.l.b16 %v16
    %v75 = vpack.c.b16 %v72, %v69
    %v76 = vpack.c.b16 %v73, %v70
    %v77 = vpack.c.b16 %v74, %v71
    %v129 = vunpack.c.l.b16 %v17
    %v130 = vunpack.c.h.b16 %v17
    %v131 = vunpack.c.l.b16 %v18
    %v132 = vunpack.c.h.b16 %v18
    %v133 = vunpack.c.l.b16 %v19
    %v134 = vunpack.c.h.b16 %v19
    %v135 = vunpack.c.l.b16 %v20
    %v136 = vunpack.c.h.b16 %v20
    %v137 = vunpack.c.l.b16 %v21
    %v138 = vunpack.c.h.b16 %v21
    %v139 = vunpack.c.l.b16 %v22
    %v140 = vunpack.c.h.b16 %v22
    %v141 = vunpack.c.l.b16 %v23
    %v142 = vunpack.c.h.b16 %v23
    %v143 = vunpack.c.l.b16 %v24
    %v144 = vunpack.c.h.b16 %v24
    %v145 = vunpack.c.l.b16 %v25
    %v146 = vunpack.c.h.b16 %v25
    %v147 = vunpack.c.l.b16 %v26
    %v148 = vunpack.c.h.b16 %v26
    %v149 = vunpack.c.l.b16 %v27
    %v150 = vunpack.c.h.b16 %v27
    %v151 = vunpack.c.l.b16 %v28
    %v152 = vunpack.c.h.b16 %v28
    %v153 = vunpack.c.l.b16 %v29
    %v154 = vunpack.c.h.b16 %v29
    %v155 = vunpack.c.l.b16 %v30
    %v156 = vunpack.c.h.b16 %v30
    %v157 = vunpack.c.l.b16 %v31
    %v158 = vunpack.c.h.b16 %v31
    %v159 = vunpack.c.l.b16 %v32
    %v160 = vunpack.c.h.b16 %v32
    %v161 = vunpack.c.l.b16 %v33
    %v162 = vunpack.c.h.b16 %v33
    %v163 = vunpack.c.l.b16 %v34
    %v164 = vunpack.c.h.b16 %v34
    %v165 = vunpack.c.l.b16 %v35
    %v166 = vunpack.c.h.b16 %v35
    %v167 = vunpack.c.l.b16 %v36
    %v168 = vunpack.c.h.b16 %v36
    %v169 = vunpack.c.l.b16 %v37
    %v170 = vunpack.c.h.b16 %v37
    %v171 = vunpack.c.l.b16 %v38
    %v172 = vunpack.c.h.b16 %v38
    %v173 = vunpack.c.l.b16 %v39
    %v174 = vunpack.c.h.b16 %v39
    %v175 = vunpack.c.l.b16 %v40
    %v176 = vunpack.c.h.b16 %v40
    %v177 = vunpack.c.l.b16 %v41
    %v178 = vunpack.c.h.b16 %v41
    %v179 = vunpack.c.l.b16 %v42
    %v180 = vunpack.c.h.b16 %v42
    %v181 = vunpack.c.l.b16 %v43
    %v182 = vunpack.c.h.b16 %v43
    %v183 = vunpack.c.l.b16 %v44
    %v184 = vunpack.c.h.b16 %v44
    %v185 = vunpack.c.l.b16 %v45
    %v186 = vunpack.c.h.b16 %v45
    %v187 = vunpack.c.l.b16 %v46
    %v188 = vunpack.c.h.b16 %v46
    %v189 = vunpack.c.l.b16 %v47
    %v190 = vunpack.c.h.b16 %v47
    %v191 = vunpack.c.l.b16 %v48
    %v192 = vunpack.c.h.b16 %v48
    %v193 = vunpack.c.l.b16 %v49
    %v194 = vunpack.c.h.b16 %v49
    %v195 = vunpack.c.l.b16 %v50
    %v196 = vunpack.c.h.b16 %v50
    %v197 = vunpack.c.l.b16 %v51
    %v198 = vunpack.c.h.b16 %v51
    %v199 = vunpack.c.l.b16 %v52
    %v200 = vunpack.c.h.b16 %v52
    %v201 = vunpack.c.l.b16 %v53
    %v202 = vunpack.c.h.b16 %v53
    %v203 = vunpack.c.l.b16 %v54
    %v204 = vunpack.c.h.b16 %v54
    %v205 = vunpack.c.l.b16 %v55
    %v206 = vunpack.c.h.b16 %v55
    %v207 = vunpack.c.l.b16 %v56
    %v208 = vunpack.c.h.b16 %v56
    %v209 = vunpack.c.l.b16 %v57
    %v210 = vunpack.c.h.b16 %v57
    %v211 = vunpack.c.l.b16 %v58
    %v212 = vunpack.c.h.b16 %v58
    %v213 = vunpack.c.l.b16 %v59
    %v214 = vunpack.c.h.b16 %v59
    %v215 = vunpack.c.l.b16 %v60
    %v216 = vunpack.c.h.b16 %v60
    %v217 = vunpack.c.l.b16 %v61
    %v218 = vunpack.c.h.b16 %v61
    %v219 = vunpack.c.l.b16 %v62
    %v220 = vunpack.c.h.b16 %v62
    %v221 = vunpack.c.l.b16 %v63
    %v222 = vunpack.c.h.b16 %v63
    %v223 = vunpack.c.l.b16 %v64
    %v224 = vunpack.c.h.b16 %v64
    %v225 = vpack.c.b16 %v131, %v129
    %v226 = vpack.c.b16 %v132, %v130
    %v227 = vpack.c.b16 %v135, %v133
    %v228 = vpack.c.b16 %v136, %v134
    %v229 = vpack.c.b16 %v139, %v137
    %v230 = vpack.c.b16 %v140, %v138
    %v231 = vpack.c.b16 %v143, %v141
    %v232 = vpack.c.b16 %v144, %v142
    %v233 = vpack.c.b16 %v147, %v145
    %v234 = vpack.c.b16 %v148, %v146
    %v235 = vpack.c.b16 %v151, %v149
    %v236 = vpack.c.b16 %v152, %v150
    %v237 = vpack.c.b16 %v155, %v153
    %v238 = vpack.c.b16 %v156, %v154
    %v239 = vpack.c.b16 %v159, %v157
    %v240 = vpack.c.b16 %v160, %v158
    %v241 = vpack.c.b16 %v163, %v161
    %v242 = vpack.c.b16 %v164, %v162
    %v243 = vpack.c.b16 %v167, %v165
    %v244 = vpack.c.b16 %v168, %v166
    %v245 = vpack.c.b16 %v171, %v169
    %v246 = vpack.c.b16 %v172, %v170
    %v247 = vpack.c.b16 %v175, %v173
    %v248 = vpack.c.b16 %v176, %v174
    %v249 = vpack.c.b16 %v179, %v177
    %v250 = vpack.c.b16 %v180, %v178
    %v251 = vpack.c.b16 %v183, %v181
    %v252 = vpack.c.b16 %v184, %v182
    %v253 = vpack.c.b16 %v187, %v185
    %v254 = vpack.c.b16 %v188, %v186
    %v255 = vpack.c.b16 %v191, %v189
    %v256 = vpack.c.b16 %v192, %v190
    %v257 = vpack.c.b16 %v195, %v193
    %v258 = vpack.c.b16 %v196, %v194
    %v259 = vpack.c.b16 %v199, %v197
    %v260 = vpack.c.b16 %v200, %v198
    %v261 = vpack.c.b16 %v203, %v201
    %v262 = vpack.c.b16 %v204, %v202
    %v263 = vpack.c.b16 %v207, %v205
    %v264 = vpack.c.b16 %v208, %v206
    %v265 = vpack.c.b16 %v211, %v209
    %v266 = vpack.c.b16 %v212, %v210
    %v267 = vpack.c.b16 %v215, %v213
    %v268 = vpack.c.b16 %v216, %v214
    %v269 = vpack.c.b16 %v219, %v217
    %v270 = vpack.c.b16 %v220, %v218
    %v271 = vpack.c.b16 %v223, %v221
    %v272 = vpack.c.b16 %v224, %v222
    %321 = vmatprep.subr.bf16.mxu0 %v240
    %322 = vmatpush1.bf16.msra.mxu0 %v239
    %323 = vmatprep.subr.bf16.mxu0 %v238
    %324 = vmatpush1.bf16.msra.mxu0 %v237
    %325 = vmatprep.subr.bf16.mxu0 %v236
    %326 = vmatpush1.bf16.msra.mxu0 %v235
    %327 = vmatprep.subr.bf16.mxu0 %v234
    %328 = vmatpush1.bf16.msra.mxu0 %v233
    %329 = vmatprep.subr.bf16.mxu0 %v232
    %330 = vmatpush1.bf16.msra.mxu0 %v231
    %331 = vmatprep.subr.bf16.mxu0 %v230
    %332 = vmatpush1.bf16.msra.mxu0 %v229
    %333 = vmatprep.subr.bf16.mxu0 %v228
    %334 = vmatpush1.bf16.msra.mxu0 %v227
    %335 = vmatprep.subr.bf16.mxu0 %v226
    %336 = vmatpush1.bf16.msra.mxu0 %v225
    %337 = vmatprep.subr.bf16.mxu0 %v256
    %338 = vmatpush2.bf16.msra.mxu0 %v255
    %339 = vmatprep.subr.bf16.mxu0 %v254
    %340 = vmatpush2.bf16.msra.mxu0 %v253
    %341 = vmatprep.subr.bf16.mxu0 %v252
    %342 = vmatpush2.bf16.msra.mxu0 %v251
    %343 = vmatprep.subr.bf16.mxu0 %v250
    %344 = vmatpush2.bf16.msra.mxu0 %v249
    %345 = vmatprep.subr.bf16.mxu0 %v248
    %346 = vmatpush2.bf16.msra.mxu0 %v247
    %347 = vmatprep.subr.bf16.mxu0 %v246
    %348 = vmatpush2.bf16.msra.mxu0 %v245
    %349 = vmatprep.subr.bf16.mxu0 %v244
    %350 = vmatpush2.bf16.msra.mxu0 %v243
    %351 = vmatprep.subr.bf16.mxu0 %v242
    %352 = vmatpush2.bf16.msra.mxu0 %v241
    %353 = vmatprep.mubr.bf16.mxu0 %v76
    %354 = vmatmul.mubr.bf16.gmra.mxu0 %v75
    %v355 = vpop.f32.mrf.mxu0
    %v356 = vadd.f32 0.0, %v355
    %v357 = vpop.f32.mrf.mxu0
    %v358 = vadd.f32 0.0, %v357
    %v359 = vpop.f32.mrf.mxu0
    %v360 = vadd.f32 0.0, %v359
    %v361 = vpop.f32.mrf.mxu0
    %v362 = vadd.f32 0.0, %v361
    %363 = vdwg.mxu0
    %364 = vmatprep.subr.bf16.mxu0 %v272
    %365 = vmatpush1.bf16.msra.mxu0 %v271
    %366 = vmatprep.subr.bf16.mxu0 %v270
    %367 = vmatpush1.bf16.msra.mxu0 %v269
    %368 = vmatprep.subr.bf16.mxu0 %v268
    %369 = vmatpush1.bf16.msra.mxu0 %v267
    %370 = vmatprep.subr.bf16.mxu0 %v266
    %371 = vmatpush1.bf16.msra.mxu0 %v265
    %372 = vmatprep.subr.bf16.mxu0 %v264
    %373 = vmatpush1.bf16.msra.mxu0 %v263
    %374 = vmatprep.subr.bf16.mxu0 %v262
    %375 = vmatpush1.bf16.msra.mxu0 %v261
    %376 = vmatprep.subr.bf16.mxu0 %v260
    %377 = vmatpush1.bf16.msra.mxu0 %v259
    %378 = vmatprep.subr.bf16.mxu0 %v258
    %379 = vmatpush1.bf16.msra.mxu0 %v257
    %380 = vmatprep.subr.bf16.mxu0 0
    %381 = vmatpush2.bf16.msra.mxu0 0
    %382 = vmatprep.subr.bf16.mxu0 0
    %383 = vmatpush2.bf16.msra.mxu0 0
    %384 = vmatprep.subr.bf16.mxu0 0
    %385 = vmatpush2.bf16.msra.mxu0 0
    %386 = vmatprep.subr.bf16.mxu0 0
    %387 = vmatpush2.bf16.msra.mxu0 0
    %388 = vmatprep.subr.bf16.mxu0 0
    %389 = vmatpush2.bf16.msra.mxu0 0
    %390 = vmatprep.subr.bf16.mxu0 0
    %391 = vmatpush2.bf16.msra.mxu0 0
    %392 = vmatprep.subr.bf16.mxu0 0
    %393 = vmatpush2.bf16.msra.mxu0 0
    %394 = vmatprep.subr.bf16.mxu0 0
    %395 = vmatpush2.bf16.msra.mxu0 0
    %396 = vmatprep.mubr.bf16.mxu0 0
    %397 = vmatmul.mubr.bf16.gmra.mxu0 %v77
    %v398 = vpop.f32.mrf.mxu0
    %v399 = vadd.f32 %v356, %v398
    %v400 = vpop.f32.mrf.mxu0
    %v401 = vadd.f32 %v358, %v400
    %v402 = vpop.f32.mrf.mxu0
    %v403 = vadd.f32 %v360, %v402
    %v404 = vpop.f32.mrf.mxu0
    %v405 = vadd.f32 %v362, %v404
    %406 = vdwg.mxu0
    %v407 = vlaneseq
    %v408 = vshrl.u32 %v407, 7
    %v409 = vlaneseq
    %v410 = vand.u32 %v409, 127
    %vm411 = vcmp.le.s32.totalorder %v410, %v408
    %v412 = vpack.c.bf16 %v399, %v399
    %v413 = vpack.c.bf16 %v403, %v403
    %415 = vrot.lane.b32.xlu0 %v412, 64
    %v416 = vpop.permute.xlu0 %415
    %vm417 = vcmask 523264
    %v419 = vsel %vm417, %v416, 0
    %v422 = vsel %vm417, %v412, 0
    %424 = vmatprep.subr.bf16.mxu0 0
    %425 = vmatpush1.bf16.xpose.msra.mxu0 0
    %426 = vmatprep.subr.bf16.mxu0 0
    %427 = vmatpush1.bf16.xpose.msra.mxu0 0
    %428 = vmatprep.subr.bf16.mxu0 0
    %429 = vmatpush1.bf16.xpose.msra.mxu0 0
    %430 = vmatprep.subr.bf16.mxu0 0
    %431 = vmatpush1.bf16.xpose.msra.mxu0 0
    %432 = vmatprep.subr.bf16.mxu0 0
    %433 = vmatpush1.bf16.xpose.msra.mxu0 0
    %434 = vmatprep.subr.bf16.mxu0 0
    %435 = vmatpush1.bf16.xpose.msra.mxu0 0
    %436 = vmatprep.subr.bf16.mxu0 0
    %437 = vmatpush1.bf16.xpose.msra.mxu0 0
    %438 = vmatprep.subr.bf16.mxu0 0
    %439 = vmatpush1.bf16.xpose.msra.mxu0 %v422
    %440 = vmatprep.subr.bf16.mxu0 0
    %441 = vmatpush2.bf16.xpose.msra.mxu0 0
    %442 = vmatprep.subr.bf16.mxu0 0
    %443 = vmatpush2.bf16.xpose.msra.mxu0 0
    %444 = vmatprep.subr.bf16.mxu0 0
    %445 = vmatpush2.bf16.xpose.msra.mxu0 0
    %446 = vmatprep.subr.bf16.mxu0 0
    %447 = vmatpush2.bf16.xpose.msra.mxu0 0
    %448 = vmatprep.subr.bf16.mxu0 0
    %449 = vmatpush2.bf16.xpose.msra.mxu0 0
    %450 = vmatprep.subr.bf16.mxu0 0
    %451 = vmatpush2.bf16.xpose.msra.mxu0 0
    %452 = vmatprep.subr.bf16.mxu0 0
    %453 = vmatpush2.bf16.xpose.msra.mxu0 0
    %454 = vmatprep.subr.bf16.mxu0 0
    %455 = vmatpush2.bf16.xpose.msra.mxu0 0
    %456 = vmatprep.mubr.bf16.mxu0 0
    %457 = vmatmul.mubr.bf16.gmra.mxu0 %v419
    %v458 = vpop.f32.mrf.mxu0
    %v459 = vadd.f32 0.0, %v458
    %v460 = vpop.f32.mrf.mxu0
    %v461 = vpop.f32.mrf.mxu0
    %v462 = vpop.f32.mrf.mxu0
    %463 = vdwg.mxu0
    %465 = vrot.lane.b32.xlu0 %v413, 64
    %v466 = vpop.permute.xlu0 %465
    %v468 = vsel %vm417, %v466, 0
    %v471 = vsel %vm417, %v413, 0
    %473 = vmatprep.subr.bf16.mxu0 0
    %474 = vmatpush1.bf16.xpose.msra.mxu0 0
    %475 = vmatprep.subr.bf16.mxu0 0
    %476 = vmatpush1.bf16.xpose.msra.mxu0 0
    %477 = vmatprep.subr.bf16.mxu0 0
    %478 = vmatpush1.bf16.xpose.msra.mxu0 0
    %479 = vmatprep.subr.bf16.mxu0 0
    %480 = vmatpush1.bf16.xpose.msra.mxu0 0
    %481 = vmatprep.subr.bf16.mxu0 0
    %482 = vmatpush1.bf16.xpose.msra.mxu0 0
    %483 = vmatprep.subr.bf16.mxu0 0
    %484 = vmatpush1.bf16.xpose.msra.mxu0 0
    %485 = vmatprep.subr.bf16.mxu0 0
    %486 = vmatpush1.bf16.xpose.msra.mxu0 0
    %487 = vmatprep.subr.bf16.mxu0 0
    %488 = vmatpush1.bf16.xpose.msra.mxu0 %v471
    %489 = vmatprep.subr.bf16.mxu0 0
    %490 = vmatpush2.bf16.xpose.msra.mxu0 0
    %491 = vmatprep.subr.bf16.mxu0 0
    %492 = vmatpush2.bf16.xpose.msra.mxu0 0
    %493 = vmatprep.subr.bf16.mxu0 0
    %494 = vmatpush2.bf16.xpose.msra.mxu0 0
    %495 = vmatprep.subr.bf16.mxu0 0
    %496 = vmatpush2.bf16.xpose.msra.mxu0 0
    %497 = vmatprep.subr.bf16.mxu0 0
    %498 = vmatpush2.bf16.xpose.msra.mxu0 0
    %499 = vmatprep.subr.bf16.mxu0 0
    %500 = vmatpush2.bf16.xpose.msra.mxu0 0
    %501 = vmatprep.subr.bf16.mxu0 0
    %502 = vmatpush2.bf16.xpose.msra.mxu0 0
    %503 = vmatprep.subr.bf16.mxu0 0
    %504 = vmatpush2.bf16.xpose.msra.mxu0 0
    %505 = vmatprep.mubr.bf16.mxu0 0
    %506 = vmatmul.mubr.bf16.gmra.mxu0 %v468
    %v507 = vpop.f32.mrf.mxu0
    %v508 = vadd.f32 0.0, %v507
    %v509 = vpop.f32.mrf.mxu0
    %v510 = vpop.f32.mrf.mxu0
    %v511 = vpop.f32.mrf.mxu0
    %512 = vdwg.mxu0
    %v513 = vsel %vm411, 1, 0
    %vm514 = vcmp.eq.s32.totalorder %v513, 1
    %v515 = vsel %vm514, %v459, -1e+30
    %v516 = vsel %vm514, %v508, -1e+30
    %vm517 = vcmask 64512
    %v518 = vsel %vm517, %v515, -inf
    %519 = vmax.xlane.f32.xlu0 %v518
    %v520 = vpop.xlane.xlu0 %519
    %v521 = vsel %vm517, %v516, -inf
    %522 = vmax.xlane.f32.xlu0 %v521
    %v523 = vpop.xlane.xlu0 %522
    %v524 = vsub.f32 %v515, %v520
    %v525 = vsub.f32 %v516, %v523
    %v526 = vmul.f32 %v524, 1.442695
    %v527 = vpow.pop %v526
    %v528 = vmul.f32 %v525, 1.442695
    %v529 = vpow.pop %v528
    %v530 = vsel %vm517, %v527, 0.0
    %531 = vadd.xlane.f32.xlu0 %v530
    %v532 = vpop.xlane.xlu0 %531
    %v533 = vsel %vm517, %v529, 0.0
    %534 = vadd.xlane.f32.xlu0 %v533
    %v535 = vpop.xlane.xlu0 %534
    %v536 = vrcp.pop %v532
    %v537 = vrcp.pop %v535
    %v538 = vmul.f32 %v527, %v536
    %v539 = vmul.f32 %v529, %v537
    %v540 = vpack.c.bf16 %v538, %v538
    %v541 = vpack.c.bf16 %v539, %v539
    %v542 = vpack.c.bf16 %v401, %v401
    %v543 = vpack.c.bf16 %v405, %v405
    %v545 = vsel %vm517, %v540, 0
    %vm547 = vcmask 1043456
    %v549 = vsel %vm547, %v542, 0
    %551 = vmatprep.subr.bf16.mxu0 0
    %552 = vmatpush1.bf16.msra.mxu0 0
    %553 = vmatprep.subr.bf16.mxu0 0
    %554 = vmatpush1.bf16.msra.mxu0 0
    %555 = vmatprep.subr.bf16.mxu0 0
    %556 = vmatpush1.bf16.msra.mxu0 0
    %557 = vmatprep.subr.bf16.mxu0 0
    %558 = vmatpush1.bf16.msra.mxu0 0
    %559 = vmatprep.subr.bf16.mxu0 0
    %560 = vmatpush1.bf16.msra.mxu0 0
    %561 = vmatprep.subr.bf16.mxu0 0
    %562 = vmatpush1.bf16.msra.mxu0 0
    %563 = vmatprep.subr.bf16.mxu0 0
    %564 = vmatpush1.bf16.msra.mxu0 0
    %565 = vmatprep.subr.bf16.mxu0 0
    %566 = vmatpush1.bf16.msra.mxu0 %v549
    %567 = vmatprep.subr.bf16.mxu0 0
    %568 = vmatpush2.bf16.msra.mxu0 0
    %569 = vmatprep.subr.bf16.mxu0 0
    %570 = vmatpush2.bf16.msra.mxu0 0
    %571 = vmatprep.subr.bf16.mxu0 0
    %572 = vmatpush2.bf16.msra.mxu0 0
    %573 = vmatprep.subr.bf16.mxu0 0
    %574 = vmatpush2.bf16.msra.mxu0 0
    %575 = vmatprep.subr.bf16.mxu0 0
    %576 = vmatpush2.bf16.msra.mxu0 0
    %577 = vmatprep.subr.bf16.mxu0 0
    %578 = vmatpush2.bf16.msra.mxu0 0
    %579 = vmatprep.subr.bf16.mxu0 0
    %580 = vmatpush2.bf16.msra.mxu0 0
    %581 = vmatprep.subr.bf16.mxu0 0
    %582 = vmatpush2.bf16.msra.mxu0 0
    %583 = vmatprep.mubr.bf16.mxu0 0
    %584 = vmatmul.mubr.bf16.gmra.mxu0 %v545
    %v585 = vpop.f32.mrf.mxu0
    %v586 = vadd.f32 0.0, %v585
    %v587 = vpop.f32.mrf.mxu0
    %v588 = vpop.f32.mrf.mxu0
    %v589 = vpop.f32.mrf.mxu0
    %590 = vdwg.mxu0
    %v592 = vsel %vm517, %v541, 0
    %v595 = vsel %vm547, %v543, 0
    %597 = vmatprep.subr.bf16.mxu0 0
    %598 = vmatpush1.bf16.msra.mxu0 0
    %599 = vmatprep.subr.bf16.mxu0 0
    %600 = vmatpush1.bf16.msra.mxu0 0
    %601 = vmatprep.subr.bf16.mxu0 0
    %602 = vmatpush1.bf16.msra.mxu0 0
    %603 = vmatprep.subr.bf16.mxu0 0
    %604 = vmatpush1.bf16.msra.mxu0 0
    %605 = vmatprep.subr.bf16.mxu0 0
    %606 = vmatpush1.bf16.msra.mxu0 0
    %607 = vmatprep.subr.bf16.mxu0 0
    %608 = vmatpush1.bf16.msra.mxu0 0
    %609 = vmatprep.subr.bf16.mxu0 0
    %610 = vmatpush1.bf16.msra.mxu0 0
    %611 = vmatprep.subr.bf16.mxu0 0
    %612 = vmatpush1.bf16.msra.mxu0 %v595
    %613 = vmatprep.subr.bf16.mxu0 0
    %614 = vmatpush2.bf16.msra.mxu0 0
    %615 = vmatprep.subr.bf16.mxu0 0
    %616 = vmatpush2.bf16.msra.mxu0 0
    %617 = vmatprep.subr.bf16.mxu0 0
    %618 = vmatpush2.bf16.msra.mxu0 0
    %619 = vmatprep.subr.bf16.mxu0 0
    %620 = vmatpush2.bf16.msra.mxu0 0
    %621 = vmatprep.subr.bf16.mxu0 0
    %622 = vmatpush2.bf16.msra.mxu0 0
    %623 = vmatprep.subr.bf16.mxu0 0
    %624 = vmatpush2.bf16.msra.mxu0 0
    %625 = vmatprep.subr.bf16.mxu0 0
    %626 = vmatpush2.bf16.msra.mxu0 0
    %627 = vmatprep.subr.bf16.mxu0 0
    %628 = vmatpush2.bf16.msra.mxu0 0
    %629 = vmatprep.mubr.bf16.mxu0 0
    %630 = vmatmul.mubr.bf16.gmra.mxu0 %v592
    %v631 = vpop.f32.mrf.mxu0
    %v632 = vadd.f32 0.0, %v631
    %v633 = vpop.f32.mrf.mxu0
    %v634 = vpop.f32.mrf.mxu0
    %v635 = vpop.f32.mrf.mxu0
    %636 = vdwg.mxu0
    %637 = vst.msk [vmem:[#allocation2] sm:$0xff] %vm417, %v586
    %638 = vst.msk [vmem:[#allocation2 + $0x8] sm:$0xff] %vm417, %v632
    // Predicated region
    $region10: #{tpu_custom_call.1} parent=1 // pred_check
      _
    $region11: #{tpu_custom_call.1} parent=1 // pred_check_branch
      %640 = sbr.rel (0) target = $region13
    $region12: #{tpu_custom_call.1} parent=1 // pred_region
      %s642 = ssub.s32 256, 256
      %643 = vsyncadd [#allocation3], %s642
      %s644 = sshll.u32 [#allocation2], 4
      %s645 = int_to_ptr.vmem [resolvable:$true] %s644
      %650 = dma.vmem_to_hbm [thread:$0]  %s645, 256, %s2, [#allocation3], 128, 128, 8
    $region13: #{tpu_custom_call.1} parent=1 // pred_fallthru
      _
    // Predicated region
    $region14: #{tpu_custom_call.1} parent=1 // pred_check
      _
    $region15: #{tpu_custom_call.1} parent=1 // pred_check_branch
      %652 = sbr.rel (0) target = $region17
    $region16: #{tpu_custom_call.1} parent=1 // pred_region
      %653 = dma.done [#allocation3], 256
    $region17: #{tpu_custom_call.1} parent=1 // pred_fallthru
      _
    %654 = vsyncpa [#allocation3], 1

</llo_original>
